<compile_context>
chip_gen: v6e
topology: v6e:2x2x1
jax: 0.10.0
libtpu: 0.0.40
codegen_flags: <defaults>
</compile_context>

<pallas_src>
import functools

import jax
import jax.numpy as jnp
import numpy as np
from jax.experimental import pallas as pl
from jax.experimental.pallas import tpu as pltpu


# ---------------------------------------------------------------------------
# Pass 1: router.  Tiled over token blocks; per-expert running counts carried
# in a VMEM scratch across blocks (sequential "arbitrary" grid axis).
# ---------------------------------------------------------------------------
def _router_kernel(x_ref, w_ref, b_ref, pmax_ref, dst_ref, counts_ref, *,
                   n_experts, capacity):
    E = n_experts
    TB = x_ref.shape[0]

    @pl.when(pl.program_id(0) == 0)
    def _():
        counts_ref[...] = jnp.zeros_like(counts_ref)

    # Logits matmul in the input dtype (no blanket upcast to f32); f32 accum.
    x = x_ref[...]                                               # [TB, D]
    w = w_ref[...]                                               # [D, E]
    logits = jnp.dot(x, w, preferred_element_type=jnp.float32)
    logits = logits + b_ref[...].astype(jnp.float32)             # [TB, E]

    # route_prob_max: the winning softmax prob == exp(0) / sum(exp(logits-max)).
    m = jnp.max(logits, axis=-1, keepdims=True)                  # [TB, 1]
    denom = jnp.sum(jnp.exp(logits - m), axis=-1, keepdims=True)  # [TB, 1]
    pmax = pl.reciprocal(denom, approx=False)                    # exact divide

    # Routing: argmax on logits (softmax is monotone); first index wins ties,
    # matching torch.max tie-breaking.
    e_iota = jax.lax.broadcasted_iota(jnp.int32, (TB, E), 1)
    routes = jnp.min(jnp.where(logits >= m, e_iota, E),
                     axis=-1, keepdims=True)                     # [TB, 1] int32

    # Position of each token inside its expert = (exclusive prefix count within
    # this block) + (per-expert count carried from previous blocks).  The
    # within-block prefix count uses a tiny TB x TB lower-triangular matmul on
    # the MXU; 0/1 operands are exact in bf16, accumulation in f32 (< 2^24).
    onehot = (e_iota == routes).astype(jnp.bfloat16)             # [TB, E]
    tri = (jax.lax.broadcasted_iota(jnp.int32, (TB, TB), 1)
           < jax.lax.broadcasted_iota(jnp.int32, (TB, TB), 0)).astype(jnp.bfloat16)
    excl = jnp.dot(tri, onehot, preferred_element_type=jnp.float32)   # [TB, E]
    onehot_f = onehot.astype(jnp.float32)
    base = counts_ref[...]                                       # [1, E]
    pos = jnp.sum((excl + base) * onehot_f, axis=-1, keepdims=True)   # [TB, 1]
    counts_ref[...] = base + jnp.sum(onehot_f, axis=0, keepdims=True)

    # Destination row in the [E*capacity, D] output; -1 = dropped (over capacity).
    pos_i = pos.astype(jnp.int32)
    dst = routes * capacity + pos_i
    dst = jnp.where(pos_i < capacity, dst, -1)

    # Aux outputs are token-major (TB, 1) blocks: they total N*8 bytes, noise
    # next to the [rows, D] main output, so we keep them in the natural layout
    # instead of paying an in-kernel transpose for lane-dense stores.
    pmax_ref[...] = pmax
    dst_ref[...] = dst


def _router_pass(x2, w_t, b2, *, n_experts, capacity, block_tokens):
    n_tokens, d_model = x2.shape
    nb = n_tokens // block_tokens
    kernel = functools.partial(_router_kernel, n_experts=n_experts,
                               capacity=capacity)
    pmax, dst = pl.pallas_call(
        kernel,
        out_shape=(jax.ShapeDtypeStruct((n_tokens, 1), jnp.float32),
                   jax.ShapeDtypeStruct((n_tokens, 1), jnp.int32)),
        grid=(nb,),
        in_specs=[
            pl.BlockSpec((block_tokens, d_model), lambda i: (i, 0)),
            pl.BlockSpec((d_model, n_experts), lambda i: (0, 0)),   # resident
            pl.BlockSpec((1, n_experts), lambda i: (0, 0)),         # resident
        ],
        out_specs=(
            pl.BlockSpec((block_tokens, 1), lambda i: (i, 0)),
            pl.BlockSpec((block_tokens, 1), lambda i: (i, 0)),
        ),
        scratch_shapes=[pltpu.VMEM((1, n_experts), jnp.float32)],   # carried counts
        compiler_params=pltpu.CompilerParams(
            # Counts are carried across token blocks -> sequential axis.
            dimension_semantics=("arbitrary",),
            # Explicit budget with headroom under v7x's 64 MiB physical VMEM.
            vmem_limit_bytes=48 * 1024 * 1024),
    )(x2, w_t, b2)
    return pmax[:, 0], dst[:, 0]


# ---------------------------------------------------------------------------
# Pass 2: gather.  One output row per grid step; the scalar-prefetched source
# row index drives the x BlockSpec index_map, so the kernel is pure data
# movement (no scatter matmul).  Every output row is written exactly once.
# ---------------------------------------------------------------------------
def _gather_kernel(src_ref, valid_ref, x_ref, out_ref):
    r = pl.program_id(0)
    keep = valid_ref[r] > 0

    @pl.when(keep)
    def _():
        out_ref[...] = x_ref[...]

    @pl.when(jnp.logical_not(keep))
    def _():
        out_ref[...] = jnp.zeros_like(out_ref)


def _gather_pass(x2, src, valid, *, rows):
    _, d_model = x2.shape
    return pl.pallas_call(
        _gather_kernel,
        out_shape=jax.ShapeDtypeStruct((rows, d_model), x2.dtype),
        grid_spec=pltpu.PrefetchScalarGridSpec(
            num_scalar_prefetch=2,
            grid=(rows,),
            in_specs=[pl.BlockSpec((1, d_model),
                                   lambda r, src, valid: (src[r], 0))],
            out_specs=pl.BlockSpec((1, d_model),
                                   lambda r, src, valid: (r, 0)),
        ),
        compiler_params=pltpu.CompilerParams(
            dimension_semantics=("parallel",),   # rows independent (v7x: 2 TCs)
            vmem_limit_bytes=48 * 1024 * 1024),
    )(src, valid, x2)


# ---------------------------------------------------------------------------
# Wrapper (forward pass of InterNodeMoELayerIn, drop_tokens=True semantics).
# ---------------------------------------------------------------------------
def inter_node_moe_layer_in(x, w_router, b_router, *, capacity_factor,
                            sequence_length, n_experts, block_tokens=None):
    """x: [batch, seq, d_model]; w_router: [E, d_model]; b_router: [E].

    Returns (inputs_for_intra_node_moe_tensor [E*capacity, d_model],
             route_prob_max [batch*seq]).  Output dtype follows x.
    """
    batch, seq, d_model = x.shape
    n_tokens = batch * seq
    capacity = int(capacity_factor * batch * sequence_length / n_experts)
    rows = n_experts * capacity

    x2 = x.reshape(n_tokens, d_model)
    w_t = jnp.transpose(w_router).astype(x.dtype)    # matmul in the input dtype
    b2 = b_router.reshape(1, n_experts).astype(jnp.float32)

    if block_tokens is None:
        block_tokens = n_tokens
        for cand in (512, 256, 128):                 # biggest tile that divides N
            if n_tokens % cand == 0:
                block_tokens = cand
                break
    assert n_tokens % block_tokens == 0

    pmax, dst = _router_pass(x2, w_t, b2, n_experts=n_experts,
                             capacity=capacity, block_tokens=block_tokens)

    # Invert the (unique) token->row map into row->token.  Tiny int32 scatter
    # (N elements, XLA glue); rows that receive no token keep src = -1.
    tok_ids = jnp.arange(n_tokens, dtype=jnp.int32)
    scatter_idx = jnp.where(dst >= 0, dst, rows)     # dropped tokens -> OOB -> drop
    src = jnp.full((rows,), -1, jnp.int32).at[scatter_idx].set(tok_ids, mode="drop")
    valid = (src >= 0).astype(jnp.int32)
    src_clamped = jnp.maximum(src, 0)

    out = _gather_pass(x2, src_clamped, valid, rows=rows)
    return out, pmax


# ---------------------------------------------------------------------------
# Reference + demo
# ---------------------------------------------------------------------------
def _reference_np(x, w, b, capacity, n_experts):
    batch, seq, d = x.shape
    x2 = np.asarray(x, np.float32).reshape(-1, d)
    logits = x2 @ np.asarray(w, np.float32).T + np.asarray(b, np.float32)
    logits = logits - logits.max(-1, keepdims=True)
    probs = np.exp(logits)
    probs /= probs.sum(-1, keepdims=True)
    routes = probs.argmax(-1)
    pmax = probs.max(-1)
    out = np.zeros((n_experts * capacity, d), np.float32)
    for e in range(n_experts):
        idx = np.nonzero(routes == e)[0][:capacity]   # deterministic keep-first
        out[e * capacity: e * capacity + len(idx)] = x2[idx]
    return out, pmax


if __name__ == "__main__":
    batch, seq, d_model = 2, 8, 32
    n_experts = 4
    capacity_factor = 2.0
    sequence_length = seq

    key = jax.random.PRNGKey(0)
    kx, kw, kb = jax.random.split(key, 3)
    x = jax.random.normal(kx, (batch, seq, d_model), dtype=jnp.float32)
    # deterministic "nn.Linear(hidden_size, n_experts)" params
    w_router = jax.random.normal(kw, (n_experts, d_model), dtype=jnp.float32) * 0.1
    b_router = jax.random.normal(kb, (n_experts,), dtype=jnp.float32) * 0.01

    out, route_prob_max = inter_node_moe_layer_in(
        x, w_router, b_router,
        capacity_factor=capacity_factor,
        sequence_length=sequence_length,
        n_experts=n_experts)
    out = jax.block_until_ready(out)
    route_prob_max = jax.block_until_ready(route_prob_max)

    capacity = int(capacity_factor * batch * sequence_length / n_experts)
    ref_out, ref_pmax = _reference_np(x, w_router, b_router, capacity, n_experts)
    np.testing.assert_allclose(np.asarray(out), ref_out, rtol=1e-5, atol=1e-5)
    np.testing.assert_allclose(np.asarray(route_prob_max), ref_pmax,
                               rtol=1e-5, atol=1e-5)
    print("KERNEL_OK")
</pallas_src>

<mosaic_0001>
module attributes {stable_mosaic.version = 11 : i64} {
  func.func @_router_kernel(%arg0: i32, %arg1: memref<16x32xf32, #tpu.memory_space<vmem>>, %arg2: memref<32x4xf32, #tpu.memory_space<vmem>>, %arg3: memref<1x4xf32, #tpu.memory_space<vmem>>, %arg4: memref<16x1xf32, #tpu.memory_space<vmem>>, %arg5: memref<16x1xi32, #tpu.memory_space<vmem>>, %arg6: memref<1x4xf32, #tpu.memory_space<vmem>>) attributes {dimension_semantics = [#tpu.dimension_semantics<arbitrary>], iteration_bounds = array<i64: 1>, scalar_prefetch = 0 : i64, scratch_operands = 1 : i64, tpu.core_type = #tpu.core_type<tc>, window_params = [{transform_indices = @transform_0, window_bounds = array<i64: 16, 32>}, {pipeline_mode = #tpu.pipeline_mode<synchronous>, transform_indices = @transform_1, window_bounds = array<i64: 32, 4>}, {pipeline_mode = #tpu.pipeline_mode<synchronous>, transform_indices = @transform_2, window_bounds = array<i64: 1, 4>}, {transform_indices = @transform_3, window_bounds = array<i64: 16, 1>}, {transform_indices = @transform_4, window_bounds = array<i64: 16, 1>}]} {
    %c0_i32 = arith.constant 0 : i32
    %0 = arith.cmpi eq, %arg0, %c0_i32 : i32
    %1 = arith.extui %0 : i1 to i32
    %c0_i32_0 = arith.constant 0 : i32
    %2 = arith.cmpi ne, %1, %c0_i32_0 : i32
    scf.if %2 {
      %cst_21 = arith.constant 0.000000e+00 : f32
      %57 = vector.broadcast %cst_21 : f32 to vector<1x4xf32>
      %c0_22 = arith.constant 0 : index
      %c0_23 = arith.constant 0 : index
      %58 = vector.load %arg6[%c0_22, %c0_23] : memref<1x4xf32, #tpu.memory_space<vmem>>, vector<1x4xf32>
      tpu.vector_store %arg6[%c0_22, %c0_23], %57 {strides = array<i32>} : memref<1x4xf32, #tpu.memory_space<vmem>>, vector<1x4xf32>,
    } else {
    }
    %c0 = arith.constant 0 : index
    %c0_1 = arith.constant 0 : index
    %3 = vector.load %arg1[%c0, %c0_1] : memref<16x32xf32, #tpu.memory_space<vmem>>, vector<16x32xf32>
    %c0_2 = arith.constant 0 : index
    %c0_3 = arith.constant 0 : index
    %4 = vector.load %arg2[%c0_2, %c0_3] : memref<32x4xf32, #tpu.memory_space<vmem>>, vector<32x4xf32>
    %cst = arith.constant dense<0.000000e+00> : vector<16x4xf32>
    %5 = tpu.matmul %3, %4, %cst {dimension_numbers = #tpu.dot_dimension_numbers<[1], [0], [0], [1], [0, 0, 1, 1], [], []>} : vector<16x32xf32>, vector<32x4xf32>, vector<16x4xf32> -> vector<16x4xf32>
    %c0_4 = arith.constant 0 : index
    %c0_5 = arith.constant 0 : index
    %6 = vector.load %arg3[%c0_4, %c0_5] : memref<1x4xf32, #tpu.memory_space<vmem>>, vector<1x4xf32>
    %7 = vector.broadcast %6 : vector<1x4xf32> to vector<16x4xf32>
    %8 = arith.addf %5, %7 : vector<16x4xf32>
    %cst_6 = arith.constant dense<0xFF800000> : vector<16xf32>
    %9 = vector.multi_reduction <maximumf>, %8, %cst_6 [1] : vector<16x4xf32> to vector<16xf32>
    %10 = vector.shape_cast %9 : vector<16xf32> to vector<16x1xf32>
    %11 = vector.broadcast %10 : vector<16x1xf32> to vector<16x4xf32>
    %12 = arith.subf %8, %11 : vector<16x4xf32>
    %13 = math.exp %12 : vector<16x4xf32>
    %cst_7 = arith.constant dense<0.000000e+00> : vector<16xf32>
    %14 = vector.multi_reduction <add>, %13, %cst_7 [1] : vector<16x4xf32> to vector<16xf32>
    %15 = vector.shape_cast %14 : vector<16xf32> to vector<16x1xf32>
    %16 = tpu.reciprocal %15 : vector<16x1xf32> -> vector<16x1xf32>
    %17 = tpu.iota {dimensions = array<i32: 1>} : vector<16x4xi32>
    %18 = vector.broadcast %10 : vector<16x1xf32> to vector<16x4xf32>
    %19 = arith.cmpf oge, %8, %18 : vector<16x4xf32>
    %c4_i32 = arith.constant 4 : i32
    %20 = vector.broadcast %c4_i32 : i32 to vector<16x4xi32>
    %21 = arith.select %19, %17, %20 : vector<16x4xi1>, vector<16x4xi32>
    %cst_8 = arith.constant dense<2147483647> : vector<16xi32>
    %22 = vector.multi_reduction <minsi>, %21, %cst_8 [1] : vector<16x4xi32> to vector<16xi32>
    %23 = vector.shape_cast %22 : vector<16xi32> to vector<16x1xi32>
    %24 = vector.broadcast %23 : vector<16x1xi32> to vector<16x4xi32>
    %25 = arith.cmpi eq, %17, %24 : vector<16x4xi32>
    %26 = arith.extui %25 : vector<16x4xi1> to vector<16x4xi32>
    %27 = arith.sitofp %26 : vector<16x4xi32> to vector<16x4xf32>
    %28 = arith.truncf %27 : vector<16x4xf32> to vector<16x4xbf16>
    %29 = tpu.iota {dimensions = array<i32: 1>} : vector<16x16xi32>
    %30 = tpu.iota {dimensions = array<i32: 0>} : vector<16x16xi32>
    %31 = arith.cmpi slt, %29, %30 : vector<16x16xi32>
    %32 = arith.extui %31 : vector<16x16xi1> to vector<16x16xi32>
    %33 = arith.sitofp %32 : vector<16x16xi32> to vector<16x16xf32>
    %34 = arith.truncf %33 : vector<16x16xf32> to vector<16x16xbf16>
    %cst_9 = arith.constant dense<0.000000e+00> : vector<16x4xf32>
    %35 = tpu.matmul %34, %28, %cst_9 {dimension_numbers = #tpu.dot_dimension_numbers<[1], [0], [0], [1], [0, 0, 1, 1], [], []>} : vector<16x16xbf16>, vector<16x4xbf16>, vector<16x4xf32> -> vector<16x4xf32>
    %36 = arith.extf %28 : vector<16x4xbf16> to vector<16x4xf32>
    %c0_10 = arith.constant 0 : index
    %c0_11 = arith.constant 0 : index
    %37 = vector.load %arg6[%c0_10, %c0_11] : memref<1x4xf32, #tpu.memory_space<vmem>>, vector<1x4xf32>
    %38 = vector.broadcast %37 : vector<1x4xf32> to vector<16x4xf32>
    %39 = arith.addf %35, %38 : vector<16x4xf32>
    %40 = arith.mulf %39, %36 : vector<16x4xf32>
    %cst_12 = arith.constant dense<0.000000e+00> : vector<16xf32>
    %41 = vector.multi_reduction <add>, %40, %cst_12 [1] : vector<16x4xf32> to vector<16xf32>
    %42 = vector.shape_cast %41 : vector<16xf32> to vector<16x1xf32>
    %cst_13 = arith.constant dense<0.000000e+00> : vector<4xf32>
    %43 = vector.multi_reduction <add>, %36, %cst_13 [0] : vector<16x4xf32> to vector<4xf32>
    %44 = vector.shape_cast %43 : vector<4xf32> to vector<1x4xf32>
    %45 = arith.addf %37, %44 : vector<1x4xf32>
    %c0_14 = arith.constant 0 : index
    %c0_15 = arith.constant 0 : index
    %46 = vector.load %arg6[%c0_14, %c0_15] : memref<1x4xf32, #tpu.memory_space<vmem>>, vector<1x4xf32>
    tpu.vector_store %arg6[%c0_14, %c0_15], %45 {strides = array<i32>} : memref<1x4xf32, #tpu.memory_space<vmem>>, vector<1x4xf32>,
    %47 = arith.fptosi %42 : vector<16x1xf32> to vector<16x1xi32>
    %c8_i32 = arith.constant 8 : i32
    %48 = vector.broadcast %c8_i32 : i32 to vector<16x1xi32>
    %49 = arith.muli %23, %48 : vector<16x1xi32>
    %50 = arith.addi %49, %47 : vector<16x1xi32>
    %c8_i32_16 = arith.constant 8 : i32
    %51 = vector.broadcast %c8_i32_16 : i32 to vector<16x1xi32>
    %52 = arith.cmpi slt, %47, %51 : vector<16x1xi32>
    %c-1_i32 = arith.constant -1 : i32
    %53 = vector.broadcast %c-1_i32 : i32 to vector<16x1xi32>
    %54 = arith.select %52, %50, %53 : vector<16x1xi1>, vector<16x1xi32>
    %c0_17 = arith.constant 0 : index
    %c0_18 = arith.constant 0 : index
    %55 = vector.load %arg4[%c0_17, %c0_18] : memref<16x1xf32, #tpu.memory_space<vmem>>, vector<16x1xf32>
    tpu.vector_store %arg4[%c0_17, %c0_18], %16 {strides = array<i32>} : memref<16x1xf32, #tpu.memory_space<vmem>>, vector<16x1xf32>,
    %c0_19 = arith.constant 0 : index
    %c0_20 = arith.constant 0 : index
    %56 = vector.load %arg5[%c0_19, %c0_20] : memref<16x1xi32, #tpu.memory_space<vmem>>, vector<16x1xi32>
    tpu.vector_store %arg5[%c0_19, %c0_20], %54 {strides = array<i32>} : memref<16x1xi32, #tpu.memory_space<vmem>>, vector<16x1xi32>,
    return
  }
  func.func @transform_0(%arg0: i32) -> (i32, i32) {
    %c0_i32 = arith.constant 0 : i32
    %c0_i32_0 = arith.constant 0 : i32
    return %arg0, %c0_i32 : i32, i32
  }
  func.func @transform_1(%arg0: i32) -> (i32, i32) {
    %c0_i32 = arith.constant 0 : i32
    %c0_i32_0 = arith.constant 0 : i32
    %c0_i32_1 = arith.constant 0 : i32
    return %c0_i32, %c0_i32_0 : i32, i32
  }
  func.func @transform_2(%arg0: i32) -> (i32, i32) {
    %c0_i32 = arith.constant 0 : i32
    %c0_i32_0 = arith.constant 0 : i32
    %c0_i32_1 = arith.constant 0 : i32
    return %c0_i32, %c0_i32_0 : i32, i32
  }
  func.func @transform_3(%arg0: i32) -> (i32, i32) {
    %c0_i32 = arith.constant 0 : i32
    %c0_i32_0 = arith.constant 0 : i32
    return %arg0, %c0_i32 : i32, i32
  }
  func.func @transform_4(%arg0: i32) -> (i32, i32) {
    %c0_i32 = arith.constant 0 : i32
    %c0_i32_0 = arith.constant 0 : i32
    return %arg0, %c0_i32 : i32, i32
  }
}

</mosaic_0001>

<llo_original>
// kernel: tpu_custom_call.1
$region0: #{tpu_custom_call.1}
  #allocation0 [shape = 'u32[]', space=smem, size = 0x4, offset = 0x4, fixed_abs, tag = 'smem constant byte address 0x4 - core index']
  #allocation1 [shape = 'u32[144,128]{1,0:T(1,128)}', space=vmem, size = 0x12000, scoped, tag = 'internal scratch']
  #allocation2 [shape = 'f32[1,4]{1,0:T(1,128)}', space=vmem, size = 0x200, scoped, tag = 'scratch operand']
  %s0 = inlined_call_operand.vmem [shape: f32[16,32], index: 0, kind: input, shape index: {}]
  %s1 = inlined_call_operand.vmem [shape: f32[32,4], index: 1, kind: input, shape index: {}]
  %s2 = inlined_call_operand.vmem [shape: f32[1,4], index: 2, kind: input, shape index: {}]
  %s3 = inlined_call_operand.vmem [shape: f32[16,1], index: 3, kind: output, shape index: {0}]
  %s4 = inlined_call_operand.vmem [shape: s32[16,1], index: 4, kind: output, shape index: {1}]
  %5 = xla_tuple %s3, %s4
  %s6 = sld [smem:[#allocation0]]
  $region34: #{tpu_custom_call.1} parent=0
    _
  %s8 = ssub.s32 1, %s6
  %s9 = scalar_select 0, %s8, %s6
  // Predicated region
  $region2: #{tpu_custom_call.1} parent=0 // pred_check
    _
  $region3: #{tpu_custom_call.1} parent=0 // pred_check_branch
    %11 = sbr.rel (0) target = $region5
  $region4: #{tpu_custom_call.1} parent=0 // pred_region
    _
  $region5: #{tpu_custom_call.1} parent=0 // pred_fallthru
    _
  // Predicated region
  $region6: #{tpu_custom_call.1} parent=0 // pred_check
    _
  $region7: #{tpu_custom_call.1} parent=0 // pred_check_branch
    %13 = sbr.rel (0) target = $region9
  $region8: #{tpu_custom_call.1} parent=0 // pred_region
    _
  $region9: #{tpu_custom_call.1} parent=0 // pred_fallthru
    _
  // Predicated region
  $region10: #{tpu_custom_call.1} parent=0 // pred_check
    _
  $region11: #{tpu_custom_call.1} parent=0 // pred_check_branch
    %15 = sbr.rel (0) target = $region13
  $region12: #{tpu_custom_call.1} parent=0 // pred_region
    _
  $region13: #{tpu_custom_call.1} parent=0 // pred_fallthru
    _
  %p17 = scmp.eq.s32.totalorder 0, 0
  // Predicated region
  $region14: #{tpu_custom_call.1} parent=0 // pred_check
    %p18 = pneg %p17
  $region15: #{tpu_custom_call.1} parent=0 // pred_check_branch
    %20 = sbr.rel (%p18) target = $region17
  $region16: #{tpu_custom_call.1} parent=0 // pred_region
    %vm21 = vcmask 24576
    %22 = vst.msk [vmem:[#allocation2] sm:$0x1] %vm21, 0.0
  $region17: #{tpu_custom_call.1} parent=0 // pred_fallthru
    _
  %v23 = vld [vmem:[%s0] sm:$0xff]
  %v24 = vld [vmem:[%s0 + $0x8] sm:$0xff]
  %v25 = vld [vmem:[%s1] sm:$0xff]
  %v26 = vld [vmem:[%s1 + $0x8] sm:$0xff]
  %v27 = vld [vmem:[%s1 + $0x10] sm:$0xff]
  %v28 = vld [vmem:[%s1 + $0x18] sm:$0xff]
  %v29 = vld [vmem:[%s2] sm:$0x1]
  %v31 = vlaneseq
  %v32 = vshrl.u32 %v31, 7
  %v33 = vsub.s32 0, %v32
  %v34 = vrot.slane %v29, %v33
  %vm36 = vcmask 261120
  %v38 = vsel %vm36, %v23, 0
  %v41 = vsel %vm36, %v24, 0
  %43 = vmatprep.subr.mxu0 0.0
  %44 = vmatpush1.msra.mxu0 0.0
  %45 = vmatprep.subr.mxu0 0.0
  %46 = vmatpush1.msra.mxu0 0.0
  %47 = vmatprep.subr.mxu0 0.0
  %48 = vmatpush1.msra.mxu0 0.0
  %49 = vmatprep.subr.mxu0 0.0
  %50 = vmatpush1.msra.mxu0 0.0
  %51 = vmatprep.subr.mxu0 0.0
  %52 = vmatpush1.msra.mxu0 0.0
  %53 = vmatprep.subr.mxu0 0.0
  %54 = vmatpush1.msra.mxu0 0.0
  %55 = vmatprep.subr.mxu0 0.0
  %56 = vmatpush1.msra.mxu0 0.0
  %57 = vmatprep.subr.mxu0 0.0
  %58 = vmatpush1.msra.mxu0 0.0
  %59 = vmatprep.subr.mxu0 0.0
  %60 = vmatpush1.msra.mxu0 0.0
  %61 = vmatprep.subr.mxu0 0.0
  %62 = vmatpush1.msra.mxu0 0.0
  %63 = vmatprep.subr.mxu0 0.0
  %64 = vmatpush1.msra.mxu0 0.0
  %65 = vmatprep.subr.mxu0 0.0
  %66 = vmatpush1.msra.mxu0 0.0
  %67 = vmatprep.subr.mxu0 0.0
  %68 = vmatpush1.msra.mxu0 %v28
  %69 = vmatprep.subr.mxu0 0.0
  %70 = vmatpush1.msra.mxu0 %v27
  %71 = vmatprep.subr.mxu0 0.0
  %72 = vmatpush1.msra.mxu0 %v26
  %73 = vmatprep.subr.mxu0 0.0
  %74 = vmatpush1.msra.mxu0 %v25
  %75 = vmatprep.subr.mxu0 0.0
  %76 = vmatpush2.msra.mxu0 0.0
  %77 = vmatprep.subr.mxu0 0.0
  %78 = vmatpush2.msra.mxu0 0.0
  %79 = vmatprep.subr.mxu0 0.0
  %80 = vmatpush2.msra.mxu0 0.0
  %81 = vmatprep.subr.mxu0 0.0
  %82 = vmatpush2.msra.mxu0 0.0
  %83 = vmatprep.subr.mxu0 0.0
  %84 = vmatpush2.msra.mxu0 0.0
  %85 = vmatprep.subr.mxu0 0.0
  %86 = vmatpush2.msra.mxu0 0.0
  %87 = vmatprep.subr.mxu0 0.0
  %88 = vmatpush2.msra.mxu0 0.0
  %89 = vmatprep.subr.mxu0 0.0
  %90 = vmatpush2.msra.mxu0 0.0
  %91 = vmatprep.subr.mxu0 0.0
  %92 = vmatpush2.msra.mxu0 0.0
  %93 = vmatprep.subr.mxu0 0.0
  %94 = vmatpush2.msra.mxu0 0.0
  %95 = vmatprep.subr.mxu0 0.0
  %96 = vmatpush2.msra.mxu0 0.0
  %97 = vmatprep.subr.mxu0 0.0
  %98 = vmatpush2.msra.mxu0 0.0
  %99 = vmatprep.subr.mxu0 0.0
  %100 = vmatpush2.msra.mxu0 0.0
  %101 = vmatprep.subr.mxu0 0.0
  %102 = vmatpush2.msra.mxu0 0.0
  %103 = vmatprep.subr.mxu0 0.0
  %104 = vmatpush2.msra.mxu0 0.0
  %105 = vmatprep.subr.mxu0 0.0
  %106 = vmatpush2.msra.mxu0 0.0
  %107 = vmatprep.mubr.f32.mxu0 0.0
  %108 = vmatmul.mubr.f32.gmra.mxu0 %v38
  %v109 = vpop.f32.mrf.mxu0
  %v110 = vadd.f32 %v34, %v109
  %v111 = vpop.f32.mrf.mxu0
  %112 = vmatprep.mubr.f32.mxu0 0.0
  %113 = vmatmul.mubr.f32.gmra.mxu0 %v41
  %v114 = vpop.f32.mrf.mxu0
  %v115 = vadd.f32 %v34, %v114
  %v116 = vpop.f32.mrf.mxu0
  %117 = vdwg.mxu0
  %vm118 = vcmask 31744
  %v119 = vsel %vm118, %v110, -inf
  %120 = vmax.xlane.f32.xlu0 %v119
  %v121 = vpop.xlane.xlu0 %120
  %v122 = vsel %vm118, %v115, -inf
  %123 = vmax.xlane.f32.xlu0 %v122
  %v124 = vpop.xlane.xlu0 %123
  %v125 = vsub.f32 %v110, %v121
  %v126 = vsub.f32 %v115, %v124
  %v127 = vmul.f32 %v125, 1.442695
  %v128 = vpow.pop %v127
  %v129 = vmul.f32 %v126, 1.442695
  %v130 = vpow.pop %v129
  %v131 = vsel %vm118, %v128, 0.0
  %132 = vadd.xlane.f32.xlu0 %v131
  %v133 = vpop.xlane.xlu0 %132
  %v134 = vsel %vm118, %v130, 0.0
  %135 = vadd.xlane.f32.xlu0 %v134
  %v136 = vpop.xlane.xlu0 %135
  %v137 = vrcp.pop %v133
  %v138 = vrcp.pop %v136
  %v139 = vlaneseq
  %v140 = vand.u32 %v139, 127
  %vm141 = vcmp.ge.f32.partialorder %v110, %v121
  %vm142 = vcmp.ge.f32.partialorder %v115, %v124
  %v143 = vsel %vm141, %v140, 4
  %v144 = vsel %vm142, %v140, 4
  %v145 = vsel %vm118, %v143, 2147483647
  %v146 = vand.u32 %v145, 65535
  %v147 = vshra.s32 %v145, 16
  %v148 = vcvt.s32.f32 %v146
  %v149 = vcvt.s32.f32 %v147
  %150 = vmin.xlane.f32.xlu0 %v149
  %v151 = vpop.xlane.xlu0 %150
  %vm152 = vcmp.eq.f32.partialorder %v149, %v151
  %v153 = vsel %vm152, %v148, inf
  %154 = vmin.xlane.f32.xlu0 %v153
  %v155 = vpop.xlane.xlu0 %154
  %v156 = vcvt.f32.s32 %v155
  %v157 = vcvt.f32.s32 %v151
  %v158 = vshll.u32 %v157, 16
  %v159 = vadd.s32 %v158, %v156
  %v160 = vsel %vm118, %v144, 2147483647
  %v161 = vand.u32 %v160, 65535
  %v162 = vshra.s32 %v160, 16
  %v163 = vcvt.s32.f32 %v161
  %v164 = vcvt.s32.f32 %v162
  %165 = vmin.xlane.f32.xlu0 %v164
  %v166 = vpop.xlane.xlu0 %165
  %vm167 = vcmp.eq.f32.partialorder %v164, %v166
  %v168 = vsel %vm167, %v163, inf
  %169 = vmin.xlane.f32.xlu0 %v168
  %v170 = vpop.xlane.xlu0 %169
  %v171 = vcvt.f32.s32 %v170
  %v172 = vcvt.f32.s32 %v166
  %v173 = vshll.u32 %v172, 16
  %v174 = vadd.s32 %v173, %v171
  %vm175 = vcmp.eq.s32.totalorder %v140, %v159
  %vm176 = vcmp.eq.s32.totalorder %v140, %v174
  %v177 = vsel %vm175, 1, 0
  %v178 = vsel %vm176, 1, 0
  %v179 = vcvt.s32.f32 %v177
  %v180 = vcvt.s32.f32 %v178
  %v181 = vpack.c.bf16 %v180, %v179
  %v182 = vlaneseq
  %v183 = vshrl.u32 %v182, 7
  %v184 = vadd.s32 %v183, 8
  %vm185 = vcmp.lt.s32.totalorder %v140, %v183
  %vm186 = vcmp.lt.s32.totalorder %v140, %v184
  %v187 = vsel %vm185, 1, 0
  %v188 = vsel %vm186, 1, 0
  %v189 = vcvt.s32.f32 %v187
  %v190 = vcvt.s32.f32 %v188
  %v191 = vpack.c.bf16 %v190, %v189
  %v192 = vunpack.c.l.bf16 %v181
  %v193 = vunpack.c.h.bf16 %v181
  %v194 = vld [vmem:[#allocation2] sm:$0x1]
  %v196 = vlaneseq
  %v197 = vshrl.u32 %v196, 7
  %v198 = vsub.s32 0, %v197
  %v199 = vrot.slane %v194, %v198
  %vm201 = vcmask 130048
  %v203 = vsel %vm201, %v191, 0
  %205 = vmatprep.subr.bf16.mxu0 0
  %206 = vmatpush1.bf16.msra.mxu0 0
  %207 = vmatprep.subr.bf16.mxu0 0
  %208 = vmatpush1.bf16.msra.mxu0 0
  %209 = vmatprep.subr.bf16.mxu0 0
  %210 = vmatpush1.bf16.msra.mxu0 0
  %211 = vmatprep.subr.bf16.mxu0 0
  %212 = vmatpush1.bf16.msra.mxu0 0
  %213 = vmatprep.subr.bf16.mxu0 0
  %214 = vmatpush1.bf16.msra.mxu0 0
  %215 = vmatprep.subr.bf16.mxu0 0
  %216 = vmatpush1.bf16.msra.mxu0 0
  %217 = vmatprep.subr.bf16.mxu0 0
  %218 = vmatpush1.bf16.msra.mxu0 0
  %219 = vmatprep.subr.bf16.mxu0 0
  %220 = vmatpush1.bf16.msra.mxu0 %v181
  %221 = vmatprep.subr.bf16.mxu0 0
  %222 = vmatpush2.bf16.msra.mxu0 0
  %223 = vmatprep.subr.bf16.mxu0 0
  %224 = vmatpush2.bf16.msra.mxu0 0
  %225 = vmatprep.subr.bf16.mxu0 0
  %226 = vmatpush2.bf16.msra.mxu0 0
  %227 = vmatprep.subr.bf16.mxu0 0
  %228 = vmatpush2.bf16.msra.mxu0 0
  %229 = vmatprep.subr.bf16.mxu0 0
  %230 = vmatpush2.bf16.msra.mxu0 0
  %231 = vmatprep.subr.bf16.mxu0 0
  %232 = vmatpush2.bf16.msra.mxu0 0
  %233 = vmatprep.subr.bf16.mxu0 0
  %234 = vmatpush2.bf16.msra.mxu0 0
  %235 = vmatprep.subr.bf16.mxu0 0
  %236 = vmatpush2.bf16.msra.mxu0 0
  %237 = vmatprep.mubr.bf16.mxu0 0
  %238 = vmatmul.mubr.bf16.gmra.mxu0 %v203
  %v239 = vpop.f32.mrf.mxu0
  %v240 = vadd.f32 %v199, %v239
  %v241 = vpop.f32.mrf.mxu0
  %v242 = vpop.f32.mrf.mxu0
  %v243 = vadd.f32 %v199, %v242
  %v244 = vpop.f32.mrf.mxu0
  %245 = vdwg.mxu0
  %v246 = vmul.f32 %v240, %v192
  %v247 = vmul.f32 %v243, %v193
  %v248 = vsel %vm118, %v246, 0.0
  %249 = vadd.xlane.f32.xlu0 %v248
  %v250 = vpop.xlane.xlu0 %249
  %v251 = vsel %vm118, %v247, 0.0
  %252 = vadd.xlane.f32.xlu0 %v251
  %v253 = vpop.xlane.xlu0 %252
  %v254 = vsel %vm118, %v192, 0.0
  %v255 = vsel %vm118, %v193, 0.0
  %v256 = vadd.f32 %v254, %v255
  %v257 = vrot.slane %v256, 4
  %v258 = vadd.f32 %v256, %v257
  %v259 = vrot.slane %v258, 2
  %v260 = vadd.f32 %v258, %v259
  %v261 = vrot.slane %v260, 1
  %v262 = vadd.f32 %v260, %v261
  %v263 = vadd.f32 %v194, %v262
  %vm264 = vcmask 24576
  %265 = vst.msk [vmem:[#allocation2] sm:$0x1] %vm264, %v263
  %v266 = vcvt.f32.s32.to.zero.pseudo %v250
  %v267 = vcvt.f32.s32.to.zero.pseudo %v253
  %v268 = vmul.u32 %v159, 8
  %v269 = vmul.u32 %v174, 8
  %v270 = vadd.s32 %v268, %v266
  %v271 = vadd.s32 %v269, %v267
  %vm272 = vcmp.lt.s32.totalorder %v266, 8
  %vm273 = vcmp.lt.s32.totalorder %v267, 8
  %v274 = vsel %vm272, %v270, 4294967295
  %v275 = vsel %vm273, %v271, 4294967295
  %vm276 = vcmask 7168
  %277 = vst.msk [vmem:[%s3] sm:$0xff] %vm276, %v137
  %278 = vst.msk [vmem:[%s3 + $0x8] sm:$0xff] %vm276, %v138
  %279 = vst.msk [vmem:[%s4] sm:$0xff] %vm276, %v274
  %280 = vst.msk [vmem:[%s4 + $0x8] sm:$0xff] %vm276, %v275
  // Predicated region
  $region18: #{tpu_custom_call.1} parent=0 // pred_check
    _
  $region19: #{tpu_custom_call.1} parent=0 // pred_check_branch
    %282 = sbr.rel (0) target = $region21
  $region20: #{tpu_custom_call.1} parent=0 // pred_region
    _
  $region21: #{tpu_custom_call.1} parent=0 // pred_fallthru
    _
  // Predicated region
  $region22: #{tpu_custom_call.1} parent=0 // pred_check
    _
  $region23: #{tpu_custom_call.1} parent=0 // pred_check_branch
    %284 = sbr.rel (0) target = $region25
  $region24: #{tpu_custom_call.1} parent=0 // pred_region
    _
  $region25: #{tpu_custom_call.1} parent=0 // pred_fallthru
    _
  // Predicated region
  $region26: #{tpu_custom_call.1} parent=0 // pred_check
    _
  $region27: #{tpu_custom_call.1} parent=0 // pred_check_branch
    %286 = sbr.rel (0) target = $region29
  $region28: #{tpu_custom_call.1} parent=0 // pred_region
    _
  $region29: #{tpu_custom_call.1} parent=0 // pred_fallthru
    _
  // Predicated region
  $region30: #{tpu_custom_call.1} parent=0 // pred_check
    _
  $region31: #{tpu_custom_call.1} parent=0 // pred_check_branch
    %288 = sbr.rel (0) target = $region33
  $region32: #{tpu_custom_call.1} parent=0 // pred_region
    _
  $region33: #{tpu_custom_call.1} parent=0 // pred_fallthru
    _

</llo_original>
